<compile_context>
chip_gen: v5e
topology: v5e:2x2
jax: 0.10.0
libtpu: 0.0.40
codegen_flags: <defaults>
</compile_context>

<pallas_src>
import jax
import jax.numpy as jnp
from jax.experimental import pallas as pl
from jax.experimental.pallas import tpu as pltpu


def _twonn_kernel(x_ref, w1_ref, b1_ref, w2_ref, b2_ref, w3_ref, b3_ref, o_ref):
    # Layer 1: Linear(in_features -> hidden) + ReLU  (bf16 MXU, f32 accumulate)
    h1 = jnp.dot(x_ref[...], w1_ref[...], preferred_element_type=jnp.float32)
    h1 = jnp.maximum(h1 + b1_ref[...], 0.0)
    # Layer 2: Linear(hidden -> hidden) + ReLU
    h2 = jnp.dot(h1.astype(jnp.bfloat16), w2_ref[...],
                 preferred_element_type=jnp.float32)
    h2 = jnp.maximum(h2 + b2_ref[...], 0.0)
    # Classifier: Linear(hidden -> num_classes), no activation
    out = jnp.dot(h2.astype(jnp.bfloat16), w3_ref[...],
                  preferred_element_type=jnp.float32)
    o_ref[...] = (out + b3_ref[...]).astype(o_ref.dtype)


def _round_up(n, m):
    return ((n + m - 1) // m) * m


def twonn_forward(x_nchw, params, *, tb_max=512):
    """x_nchw: (B, C, H, W) float32. params are f32, weights stored (in, out)."""
    w1, b1, w2, b2, w3, b3 = params
    B = x_nchw.shape[0]
    in_features = w1.shape[0]
    hidden = w1.shape[1]
    num_classes = w3.shape[1]

    # Lane-dense padded sizes (multiples of 128 on the last dim).
    in_p = _round_up(in_features, 128)
    hid_p = _round_up(hidden, 128)
    cls_p = _round_up(num_classes, 128)

    # Batch tile: large (pipelined) for big batches, minimal 8-row multiple
    # for tiny ones. Pad the batch up to a whole number of tiles.
    TB = min(tb_max, _round_up(B, 8))
    Bp = _round_up(B, TB)
    n_tiles = Bp // TB

    # --- Pad operands (zeros in padded rows/cols keep semantics exact). ---
    x2d = x_nchw.reshape(B, -1).astype(jnp.bfloat16)
    assert x2d.shape[1] == in_features
    xp = jnp.zeros((Bp, in_p), jnp.bfloat16).at[:B, :in_features].set(x2d)

    def pad_w(w, r, c):
        return jnp.zeros((r, c), jnp.bfloat16).at[:w.shape[0], :w.shape[1]].set(
            w.astype(jnp.bfloat16))

    def pad_b(b, c):
        return jnp.zeros((1, c), jnp.float32).at[:, :b.shape[1]].set(
            b.astype(jnp.float32))

    w1p = pad_w(w1, in_p, hid_p)
    w2p = pad_w(w2, hid_p, hid_p)
    w3p = pad_w(w3, hid_p, cls_p)
    b1p = pad_b(b1, hid_p)
    b2p = pad_b(b2, hid_p)
    b3p = pad_b(b3, cls_p)

    # Resident (non-streamed) operands: always block (0, 0).
    resident = lambda shape: pl.BlockSpec(shape, lambda i: (0, 0))

    flops = 2 * Bp * (in_p * hid_p + hid_p * hid_p + hid_p * cls_p)
    bytes_accessed = (
        xp.size * 2                                   # bf16 x stream
        + (w1p.size + w2p.size + w3p.size) * 2        # bf16 resident weights
        + (b1p.size + b2p.size + b3p.size) * 4        # f32 biases
        + Bp * cls_p * 4                              # f32 output
    )

    out_p = pl.pallas_call(
        _twonn_kernel,
        out_shape=jax.ShapeDtypeStruct((Bp, cls_p), jnp.float32),
        grid=(n_tiles,),
        in_specs=[
            pl.BlockSpec((TB, in_p), lambda i: (i, 0)),   # streamed x tiles
            resident(w1p.shape), resident(b1p.shape),
            resident(w2p.shape), resident(b2p.shape),
            resident(w3p.shape), resident(b3p.shape),
        ],
        out_specs=pl.BlockSpec((TB, cls_p), lambda i: (i, 0)),
        compiler_params=pltpu.CompilerParams(
            dimension_semantics=("parallel",)),
        cost_estimate=pl.CostEstimate(
            flops=flops, transcendentals=0, bytes_accessed=bytes_accessed),
    )(xp, w1p, b1p, w2p, b2p, w3p, b3p)

    # Slice the lane/batch padding back off.
    return out_p[:B, :num_classes]


def init_params(key, resize, hidden_size, num_classes):
    in_features = resize ** 2
    k1, k2, k3, k4, k5, k6 = jax.random.split(key, 6)

    # Deterministic uniform init (torch-Linear-like scale); weights stored (in, out).
    def u(k, shape, fan_in):
        bound = 1.0 / jnp.sqrt(fan_in)
        return jax.random.uniform(k, shape, jnp.float32, -bound, bound)

    w1 = u(k1, (in_features, hidden_size), in_features)
    b1 = u(k2, (1, hidden_size), in_features)
    w2 = u(k3, (hidden_size, hidden_size), hidden_size)
    b2 = u(k4, (1, hidden_size), hidden_size)
    w3 = u(k5, (hidden_size, num_classes), hidden_size)
    b3 = u(k6, (1, num_classes), hidden_size)
    return (w1, b1, w2, b2, w3, b3)


def reference_forward(x_nchw, params):
    # Matches the kernel's precision choices (bf16 MXU inputs, f32 accumulate).
    w1, b1, w2, b2, w3, b3 = params
    x = x_nchw.reshape(x_nchw.shape[0], -1).astype(jnp.bfloat16)
    h1 = jnp.dot(x, w1.astype(jnp.bfloat16),
                 preferred_element_type=jnp.float32) + b1
    h1 = jnp.maximum(h1, 0.0)
    h2 = jnp.dot(h1.astype(jnp.bfloat16), w2.astype(jnp.bfloat16),
                 preferred_element_type=jnp.float32) + b2
    h2 = jnp.maximum(h2, 0.0)
    return jnp.dot(h2.astype(jnp.bfloat16), w3.astype(jnp.bfloat16),
                   preferred_element_type=jnp.float32) + b3


if __name__ == "__main__":
    resize = 16          # -> in_features = 256
    hidden_size = 32
    num_classes = 10
    batch = 2

    key = jax.random.PRNGKey(0)
    kx, kp = jax.random.split(key)
    x = jax.random.normal(kx, (batch, 1, resize, resize), dtype=jnp.float32)  # NCHW
    params = init_params(kp, resize, hidden_size, num_classes)

    out = twonn_forward(x, params)
    out = jax.block_until_ready(out)

    ref = reference_forward(x, params)
    assert out.shape == (batch, num_classes)
    assert jnp.allclose(out, ref, atol=1e-3, rtol=1e-3), "mismatch vs JAX reference"

    print("KERNEL_OK")
</pallas_src>

<mosaic_0001>
module attributes {stable_mosaic.version = 11 : i64} {
  func.func @_twonn_kernel(%arg0: i32, %arg1: memref<8x256xbf16, #tpu.memory_space<vmem>>, %arg2: memref<256x128xbf16, #tpu.memory_space<vmem>>, %arg3: memref<1x128xf32, #tpu.memory_space<vmem>>, %arg4: memref<128x128xbf16, #tpu.memory_space<vmem>>, %arg5: memref<1x128xf32, #tpu.memory_space<vmem>>, %arg6: memref<128x128xbf16, #tpu.memory_space<vmem>>, %arg7: memref<1x128xf32, #tpu.memory_space<vmem>>, %arg8: memref<8x128xf32, #tpu.memory_space<vmem>>) attributes {dimension_semantics = [#tpu.dimension_semantics<parallel>], iteration_bounds = array<i64: 1>, scalar_prefetch = 0 : i64, scratch_operands = 0 : i64, tpu.core_type = #tpu.core_type<tc>, window_params = [{transform_indices = @transform_0, window_bounds = array<i64: 8, 256>}, {pipeline_mode = #tpu.pipeline_mode<synchronous>, transform_indices = @transform_1, window_bounds = array<i64: 256, 128>}, {pipeline_mode = #tpu.pipeline_mode<synchronous>, transform_indices = @transform_2, window_bounds = array<i64: 1, 128>}, {pipeline_mode = #tpu.pipeline_mode<synchronous>, transform_indices = @transform_3, window_bounds = array<i64: 128, 128>}, {pipeline_mode = #tpu.pipeline_mode<synchronous>, transform_indices = @transform_4, window_bounds = array<i64: 1, 128>}, {pipeline_mode = #tpu.pipeline_mode<synchronous>, transform_indices = @transform_5, window_bounds = array<i64: 128, 128>}, {pipeline_mode = #tpu.pipeline_mode<synchronous>, transform_indices = @transform_6, window_bounds = array<i64: 1, 128>}, {transform_indices = @transform_7, window_bounds = array<i64: 8, 128>}]} {
    %c0 = arith.constant 0 : index
    %c0_0 = arith.constant 0 : index
    %0 = vector.load %arg1[%c0, %c0_0] : memref<8x256xbf16, #tpu.memory_space<vmem>>, vector<8x256xbf16>
    %c0_1 = arith.constant 0 : index
    %c0_2 = arith.constant 0 : index
    %1 = vector.load %arg2[%c0_1, %c0_2] : memref<256x128xbf16, #tpu.memory_space<vmem>>, vector<256x128xbf16>
    %cst = arith.constant dense<0.000000e+00> : vector<8x128xf32>
    %2 = tpu.matmul %0, %1, %cst {dimension_numbers = #tpu.dot_dimension_numbers<[1], [0], [0], [1], [0, 0, 1, 1], [], []>} : vector<8x256xbf16>, vector<256x128xbf16>, vector<8x128xf32> -> vector<8x128xf32>
    %c0_3 = arith.constant 0 : index
    %c0_4 = arith.constant 0 : index
    %3 = vector.load %arg3[%c0_3, %c0_4] : memref<1x128xf32, #tpu.memory_space<vmem>>, vector<1x128xf32>
    %4 = vector.broadcast %3 : vector<1x128xf32> to vector<8x128xf32>
    %5 = arith.addf %2, %4 : vector<8x128xf32>
    %cst_5 = arith.constant 0.000000e+00 : f32
    %6 = vector.broadcast %cst_5 : f32 to vector<8x128xf32>
    %7 = arith.maximumf %5, %6 : vector<8x128xf32>
    %8 = arith.truncf %7 : vector<8x128xf32> to vector<8x128xbf16>
    %c0_6 = arith.constant 0 : index
    %c0_7 = arith.constant 0 : index
    %9 = vector.load %arg4[%c0_6, %c0_7] : memref<128x128xbf16, #tpu.memory_space<vmem>>, vector<128x128xbf16>
    %cst_8 = arith.constant dense<0.000000e+00> : vector<8x128xf32>
    %10 = tpu.matmul %8, %9, %cst_8 {dimension_numbers = #tpu.dot_dimension_numbers<[1], [0], [0], [1], [0, 0, 1, 1], [], []>} : vector<8x128xbf16>, vector<128x128xbf16>, vector<8x128xf32> -> vector<8x128xf32>
    %c0_9 = arith.constant 0 : index
    %c0_10 = arith.constant 0 : index
    %11 = vector.load %arg5[%c0_9, %c0_10] : memref<1x128xf32, #tpu.memory_space<vmem>>, vector<1x128xf32>
    %12 = vector.broadcast %11 : vector<1x128xf32> to vector<8x128xf32>
    %13 = arith.addf %10, %12 : vector<8x128xf32>
    %cst_11 = arith.constant 0.000000e+00 : f32
    %14 = vector.broadcast %cst_11 : f32 to vector<8x128xf32>
    %15 = arith.maximumf %13, %14 : vector<8x128xf32>
    %16 = arith.truncf %15 : vector<8x128xf32> to vector<8x128xbf16>
    %c0_12 = arith.constant 0 : index
    %c0_13 = arith.constant 0 : index
    %17 = vector.load %arg6[%c0_12, %c0_13] : memref<128x128xbf16, #tpu.memory_space<vmem>>, vector<128x128xbf16>
    %cst_14 = arith.constant dense<0.000000e+00> : vector<8x128xf32>
    %18 = tpu.matmul %16, %17, %cst_14 {dimension_numbers = #tpu.dot_dimension_numbers<[1], [0], [0], [1], [0, 0, 1, 1], [], []>} : vector<8x128xbf16>, vector<128x128xbf16>, vector<8x128xf32> -> vector<8x128xf32>
    %c0_15 = arith.constant 0 : index
    %c0_16 = arith.constant 0 : index
    %19 = vector.load %arg7[%c0_15, %c0_16] : memref<1x128xf32, #tpu.memory_space<vmem>>, vector<1x128xf32>
    %20 = vector.broadcast %19 : vector<1x128xf32> to vector<8x128xf32>
    %21 = arith.addf %18, %20 : vector<8x128xf32>
    %c0_17 = arith.constant 0 : index
    %c0_18 = arith.constant 0 : index
    %22 = vector.load %arg8[%c0_17, %c0_18] : memref<8x128xf32, #tpu.memory_space<vmem>>, vector<8x128xf32>
    tpu.vector_store %arg8[%c0_17, %c0_18], %21 {strides = array<i32>} : memref<8x128xf32, #tpu.memory_space<vmem>>, vector<8x128xf32>,
    return
  }
  func.func @transform_0(%arg0: i32) -> (i32, i32) {
    %c0_i32 = arith.constant 0 : i32
    %c0_i32_0 = arith.constant 0 : i32
    return %arg0, %c0_i32 : i32, i32
  }
  func.func @transform_1(%arg0: i32) -> (i32, i32) {
    %c0_i32 = arith.constant 0 : i32
    %c0_i32_0 = arith.constant 0 : i32
    %c0_i32_1 = arith.constant 0 : i32
    return %c0_i32, %c0_i32_0 : i32, i32
  }
  func.func @transform_2(%arg0: i32) -> (i32, i32) {
    %c0_i32 = arith.constant 0 : i32
    %c0_i32_0 = arith.constant 0 : i32
    %c0_i32_1 = arith.constant 0 : i32
    return %c0_i32, %c0_i32_0 : i32, i32
  }
  func.func @transform_3(%arg0: i32) -> (i32, i32) {
    %c0_i32 = arith.constant 0 : i32
    %c0_i32_0 = arith.constant 0 : i32
    %c0_i32_1 = arith.constant 0 : i32
    return %c0_i32, %c0_i32_0 : i32, i32
  }
  func.func @transform_4(%arg0: i32) -> (i32, i32) {
    %c0_i32 = arith.constant 0 : i32
    %c0_i32_0 = arith.constant 0 : i32
    %c0_i32_1 = arith.constant 0 : i32
    return %c0_i32, %c0_i32_0 : i32, i32
  }
  func.func @transform_5(%arg0: i32) -> (i32, i32) {
    %c0_i32 = arith.constant 0 : i32
    %c0_i32_0 = arith.constant 0 : i32
    %c0_i32_1 = arith.constant 0 : i32
    return %c0_i32, %c0_i32_0 : i32, i32
  }
  func.func @transform_6(%arg0: i32) -> (i32, i32) {
    %c0_i32 = arith.constant 0 : i32
    %c0_i32_0 = arith.constant 0 : i32
    %c0_i32_1 = arith.constant 0 : i32
    return %c0_i32, %c0_i32_0 : i32, i32
  }
  func.func @transform_7(%arg0: i32) -> (i32, i32) {
    %c0_i32 = arith.constant 0 : i32
    %c0_i32_0 = arith.constant 0 : i32
    return %arg0, %c0_i32 : i32, i32
  }
}

</mosaic_0001>

<llo_original>
// kernel: tpu_custom_call.1
$region0: #{tpu_custom_call.1}
  #allocation0 [shape = 'u32[]', space=smem, size = 0x4, offset = 0x4, fixed_abs, tag = 'smem constant byte address 0x4 - core index']
  #allocation1 [shape = 'u32[72,128]{1,0:T(1,128)}', space=vmem, size = 0x9000, scoped, tag = 'internal scratch']
  %s0 = inlined_call_operand.hbm [shape: bf16[8,256], index: 0, kind: input, shape index: {}]
  %s1 = inlined_call_operand.hbm [shape: bf16[256,128], index: 1, kind: input, shape index: {}]
  %s2 = inlined_call_operand.vmem [shape: f32[1,128], index: 2, kind: input, shape index: {}]
  %s3 = inlined_call_operand.hbm [shape: bf16[128,128], index: 3, kind: input, shape index: {}]
  %s4 = inlined_call_operand.vmem [shape: f32[1,128], index: 4, kind: input, shape index: {}]
  %s5 = inlined_call_operand.hbm [shape: bf16[128,128], index: 5, kind: input, shape index: {}]
  %s6 = inlined_call_operand.vmem [shape: f32[1,128], index: 6, kind: input, shape index: {}]
  %s7 = inlined_call_operand.hbm [shape: f32[8,128], index: 7, kind: output, shape index: {}]
  %s8 = sld [smem:[#allocation0]]
  $region54: #{tpu_custom_call.1} parent=0
    _
  %s10 = ssub.s32 1, %s8
  %s11 = scalar_select 0, %s10, %s8
  $region1: #{tpu_custom_call.1} parent=0
    #allocation2 [shape = 'u8[4096]{0}', space=vmem, size = 0x1000, scoped, tag = 'input window, operand 0, single buffered']
    #allocation3 [shape = 's32[1]{0}', space=sflag, size = 0x4, scoped, tag = 'scoped memory for tpu_custom_call.1']
    #allocation4 [shape = 's32[1]{0}', space=sflag, size = 0x4, scoped, tag = 'scoped memory for tpu_custom_call.1']
    #allocation5 [shape = 'u8[65536]{0}', space=vmem, size = 0x10000, scoped, tag = 'input window, operand 1, single buffered']
    #allocation6 [shape = 's32[1]{0}', space=sflag, size = 0x4, scoped, tag = 'scoped memory for tpu_custom_call.1']
    #allocation7 [shape = 'u8[32768]{0}', space=vmem, size = 0x8000, scoped, tag = 'input window, operand 3, single buffered']
    #allocation8 [shape = 'u8[32768]{0}', space=vmem, size = 0x8000, scoped, tag = 'input window, operand 5, single buffered']
    #allocation9 [shape = 's32[1]{0}', space=sflag, size = 0x4, scoped, tag = 'scoped memory for tpu_custom_call.1']
    #allocation10 [shape = 'u8[4096]{0}', space=vmem, size = 0x1000, scoped, tag = 'output window, operand 0, single buffered']
    %12 = vsyncpa [#allocation3], 0
    %13 = vsyncpa [#allocation6], 0
    %14 = vsyncpa [#allocation9], 0
    %15 = vsyncpa [#allocation4], 0
    // Predicated region
    $region2: #{tpu_custom_call.1} parent=1 // pred_check
      _
    $region3: #{tpu_custom_call.1} parent=1 // pred_check_branch
      %17 = sbr.rel (0) target = $region5
    $region4: #{tpu_custom_call.1} parent=1 // pred_region
      %19 = vsyncadd [#allocation3], 0
      %s21 = sshll.u32 %s0, 4
      %s22 = int_to_ptr.hbm [resolvable:$true] %s21
      %s23 = sshll.u32 [#allocation2], 4
      %s24 = int_to_ptr.vmem [resolvable:$true] %s23
      %26 = dma.hbm_to_vmem [thread:$0]  %s22, 128, %s24, [#allocation3]
    $region5: #{tpu_custom_call.1} parent=1 // pred_fallthru
      _
    // Predicated region
    $region6: #{tpu_custom_call.1} parent=1 // pred_check
      _
    $region7: #{tpu_custom_call.1} parent=1 // pred_check_branch
      %28 = sbr.rel (0) target = $region9
    $region8: #{tpu_custom_call.1} parent=1 // pred_region
      %30 = vsyncadd [#allocation6], 0
      %s31 = sshll.u32 %s1, 4
      %s32 = int_to_ptr.hbm [resolvable:$true] %s31
      %s33 = sshll.u32 [#allocation5], 4
      %s34 = int_to_ptr.vmem [resolvable:$true] %s33
      %39 = dma.hbm_to_vmem [thread:$0]  %s32, 2048, %s34, [#allocation6], 64, 64, 4
    $region9: #{tpu_custom_call.1} parent=1 // pred_fallthru
      _
    // Predicated region
    $region10: #{tpu_custom_call.1} parent=1 // pred_check
      _
    $region11: #{tpu_custom_call.1} parent=1 // pred_check_branch
      %41 = sbr.rel (0) target = $region13
    $region12: #{tpu_custom_call.1} parent=1 // pred_region
      _
    $region13: #{tpu_custom_call.1} parent=1 // pred_fallthru
      _
    // Predicated region
    $region14: #{tpu_custom_call.1} parent=1 // pred_check
      _
    $region15: #{tpu_custom_call.1} parent=1 // pred_check_branch
      %43 = sbr.rel (0) target = $region17
    $region16: #{tpu_custom_call.1} parent=1 // pred_region
      %45 = vsyncadd [#allocation6], 0
      %s46 = sshll.u32 %s3, 4
      %s47 = int_to_ptr.hbm [resolvable:$true] %s46
      %s48 = sshll.u32 [#allocation7], 4
      %s49 = int_to_ptr.vmem [resolvable:$true] %s48
      %54 = dma.hbm_to_vmem [thread:$0]  %s47, 1024, %s49, [#allocation6], 64, 64, 4
    $region17: #{tpu_custom_call.1} parent=1 // pred_fallthru
      _
    // Predicated region
    $region18: #{tpu_custom_call.1} parent=1 // pred_check
      _
    $region19: #{tpu_custom_call.1} parent=1 // pred_check_branch
      %56 = sbr.rel (0) target = $region21
    $region20: #{tpu_custom_call.1} parent=1 // pred_region
      _
    $region21: #{tpu_custom_call.1} parent=1 // pred_fallthru
      _
    // Predicated region
    $region22: #{tpu_custom_call.1} parent=1 // pred_check
      _
    $region23: #{tpu_custom_call.1} parent=1 // pred_check_branch
      %58 = sbr.rel (0) target = $region25
    $region24: #{tpu_custom_call.1} parent=1 // pred_region
      %60 = vsyncadd [#allocation9], 0
      %s61 = sshll.u32 %s5, 4
      %s62 = int_to_ptr.hbm [resolvable:$true] %s61
      %s63 = sshll.u32 [#allocation8], 4
      %s64 = int_to_ptr.vmem [resolvable:$true] %s63
      %69 = dma.hbm_to_vmem [thread:$0]  %s62, 1024, %s64, [#allocation9], 64, 64, 4
    $region25: #{tpu_custom_call.1} parent=1 // pred_fallthru
      _
    // Predicated region
    $region26: #{tpu_custom_call.1} parent=1 // pred_check
      _
    $region27: #{tpu_custom_call.1} parent=1 // pred_check_branch
      %71 = sbr.rel (0) target = $region29
    $region28: #{tpu_custom_call.1} parent=1 // pred_region
      _
    $region29: #{tpu_custom_call.1} parent=1 // pred_fallthru
      _
    // Predicated region
    $region30: #{tpu_custom_call.1} parent=1 // pred_check
      _
    $region31: #{tpu_custom_call.1} parent=1 // pred_check_branch
      %73 = sbr.rel (0) target = $region33
    $region32: #{tpu_custom_call.1} parent=1 // pred_region
      %75 = dma.done [#allocation3], 128
    $region33: #{tpu_custom_call.1} parent=1 // pred_fallthru
      _
    // Predicated region
    $region34: #{tpu_custom_call.1} parent=1 // pred_check
      _
    $region35: #{tpu_custom_call.1} parent=1 // pred_check_branch
      %77 = sbr.rel (0) target = $region37
    $region36: #{tpu_custom_call.1} parent=1 // pred_region
      %79 = dma.done [#allocation6], 2048
    $region37: #{tpu_custom_call.1} parent=1 // pred_fallthru
      _
    // Predicated region
    $region38: #{tpu_custom_call.1} parent=1 // pred_check
      _
    $region39: #{tpu_custom_call.1} parent=1 // pred_check_branch
      %81 = sbr.rel (0) target = $region41
    $region40: #{tpu_custom_call.1} parent=1 // pred_region
      %83 = dma.done [#allocation6], 1024
    $region41: #{tpu_custom_call.1} parent=1 // pred_fallthru
      _
    // Predicated region
    $region42: #{tpu_custom_call.1} parent=1 // pred_check
      _
    $region43: #{tpu_custom_call.1} parent=1 // pred_check_branch
      %85 = sbr.rel (0) target = $region45
    $region44: #{tpu_custom_call.1} parent=1 // pred_region
      %87 = dma.done [#allocation9], 1024
    $region45: #{tpu_custom_call.1} parent=1 // pred_fallthru
      _
    %v88 = vld [vmem:[#allocation2] sm:$0xff]
    %v89 = vld [vmem:[#allocation5] sm:$0xf]
    %v90 = vld [vmem:[#allocation5 + $0x4] sm:$0xf]
    %v91 = vld [vmem:[#allocation5 + $0x8] sm:$0xf]
    %v92 = vld [vmem:[#allocation5 + $0xc] sm:$0xf]
    %v93 = vld [vmem:[#allocation5 + $0x10] sm:$0xf]
    %v94 = vld [vmem:[#allocation5 + $0x14] sm:$0xf]
    %v95 = vld [vmem:[#allocation5 + $0x18] sm:$0xf]
    %v96 = vld [vmem:[#allocation5 + $0x1c] sm:$0xf]
    %v97 = vld [vmem:[#allocation5 + $0x20] sm:$0xf]
    %v98 = vld [vmem:[#allocation5 + $0x24] sm:$0xf]
    %v99 = vld [vmem:[#allocation5 + $0x28] sm:$0xf]
    %v100 = vld [vmem:[#allocation5 + $0x2c] sm:$0xf]
    %v101 = vld [vmem:[#allocation5 + $0x30] sm:$0xf]
    %v102 = vld [vmem:[#allocation5 + $0x34] sm:$0xf]
    %v103 = vld [vmem:[#allocation5 + $0x38] sm:$0xf]
    %v104 = vld [vmem:[#allocation5 + $0x3c] sm:$0xf]
    %v105 = vld [vmem:[#allocation5 + $0x40] sm:$0xf]
    %v106 = vld [vmem:[#allocation5 + $0x44] sm:$0xf]
    %v107 = vld [vmem:[#allocation5 + $0x48] sm:$0xf]
    %v108 = vld [vmem:[#allocation5 + $0x4c] sm:$0xf]
    %v109 = vld [vmem:[#allocation5 + $0x50] sm:$0xf]
    %v110 = vld [vmem:[#allocation5 + $0x54] sm:$0xf]
    %v111 = vld [vmem:[#allocation5 + $0x58] sm:$0xf]
    %v112 = vld [vmem:[#allocation5 + $0x5c] sm:$0xf]
    %v113 = vld [vmem:[#allocation5 + $0x60] sm:$0xf]
    %v114 = vld [vmem:[#allocation5 + $0x64] sm:$0xf]
    %v115 = vld [vmem:[#allocation5 + $0x68] sm:$0xf]
    %v116 = vld [vmem:[#allocation5 + $0x6c] sm:$0xf]
    %v117 = vld [vmem:[#allocation5 + $0x70] sm:$0xf]
    %v118 = vld [vmem:[#allocation5 + $0x74] sm:$0xf]
    %v119 = vld [vmem:[#allocation5 + $0x78] sm:$0xf]
    %v120 = vld [vmem:[#allocation5 + $0x7c] sm:$0xf]
    %v121 = vld [vmem:[%s2] sm:$0x1]
    %v123 = vperm.slane %v121, 0
    %v126 = vunpack.c.l.b16 %v88
    %v127 = vunpack.c.h.b16 %v88
    %v128 = vpack.c.b16 %v126, %v126
    %v129 = vpack.c.b16 %v127, %v127
    %v164 = vunpack.c.l.b16 %v89
    %v165 = vunpack.c.l.b16 %v90
    %v166 = vunpack.c.l.b16 %v91
    %v167 = vunpack.c.l.b16 %v92
    %v168 = vunpack.c.l.b16 %v93
    %v169 = vunpack.c.l.b16 %v94
    %v170 = vunpack.c.l.b16 %v95
    %v171 = vunpack.c.l.b16 %v96
    %v172 = vunpack.c.l.b16 %v97
    %v173 = vunpack.c.l.b16 %v98
    %v174 = vunpack.c.l.b16 %v99
    %v175 = vunpack.c.l.b16 %v100
    %v176 = vunpack.c.l.b16 %v101
    %v177 = vunpack.c.l.b16 %v102
    %v178 = vunpack.c.l.b16 %v103
    %v179 = vunpack.c.l.b16 %v104
    %v180 = vunpack.c.l.b16 %v105
    %v181 = vunpack.c.l.b16 %v106
    %v182 = vunpack.c.l.b16 %v107
    %v183 = vunpack.c.l.b16 %v108
    %v184 = vunpack.c.l.b16 %v109
    %v185 = vunpack.c.l.b16 %v110
    %v186 = vunpack.c.l.b16 %v111
    %v187 = vunpack.c.l.b16 %v112
    %v188 = vunpack.c.l.b16 %v113
    %v189 = vunpack.c.l.b16 %v114
    %v190 = vunpack.c.l.b16 %v115
    %v191 = vunpack.c.l.b16 %v116
    %v192 = vunpack.c.l.b16 %v117
    %v193 = vunpack.c.l.b16 %v118
    %v194 = vunpack.c.l.b16 %v119
    %v195 = vunpack.c.l.b16 %v120
    %v196 = vpack.c.b16 %v165, %v164
    %v197 = vpack.c.b16 %v167, %v166
    %v198 = vpack.c.b16 %v169, %v168
    %v199 = vpack.c.b16 %v171, %v170
    %v200 = vpack.c.b16 %v173, %v172
    %v201 = vpack.c.b16 %v175, %v174
    %v202 = vpack.c.b16 %v177, %v176
    %v203 = vpack.c.b16 %v179, %v178
    %v204 = vpack.c.b16 %v181, %v180
    %v205 = vpack.c.b16 %v183, %v182
    %v206 = vpack.c.b16 %v185, %v184
    %v207 = vpack.c.b16 %v187, %v186
    %v208 = vpack.c.b16 %v189, %v188
    %v209 = vpack.c.b16 %v191, %v190
    %v210 = vpack.c.b16 %v193, %v192
    %v211 = vpack.c.b16 %v195, %v194
    %228 = vmatpush.bf16.msra.mxu0 %v203
    %229 = vmatpush.bf16.msra.mxu0 %v202
    %230 = vmatpush.bf16.msra.mxu0 %v201
    %231 = vmatpush.bf16.msra.mxu0 %v200
    %232 = vmatpush.bf16.msra.mxu0 %v199
    %233 = vmatpush.bf16.msra.mxu0 %v198
    %234 = vmatpush.bf16.msra.mxu0 %v197
    %235 = vmatpush.bf16.msra.mxu0 %v196
    %236 = vmatmul.bf16.gmra.mxu0 %v128
    %v237 = vpop.f32.mrf.mxu0
    %v238 = vadd.f32 %v123, %v237
    %v239 = vpop.f32.mrf.mxu0
    %240 = vdwg.mxu0
    %241 = vmatpush.bf16.msra.mxu0 %v211
    %242 = vmatpush.bf16.msra.mxu0 %v210
    %243 = vmatpush.bf16.msra.mxu0 %v209
    %244 = vmatpush.bf16.msra.mxu0 %v208
    %245 = vmatpush.bf16.msra.mxu0 %v207
    %246 = vmatpush.bf16.msra.mxu0 %v206
    %247 = vmatpush.bf16.msra.mxu0 %v205
    %248 = vmatpush.bf16.msra.mxu0 %v204
    %249 = vmatmul.bf16.gmra.mxu0 %v129
    %v250 = vpop.f32.mrf.mxu0
    %v251 = vadd.f32 %v238, %v250
    %v252 = vpop.f32.mrf.mxu0
    %253 = vdwg.mxu0
    %v254 = vmax.f32 %v251, 0.0
    %v255 = vpack.c.bf16 %v254, %v254
    %v256 = vld [vmem:[#allocation7] sm:$0xf]
    %v257 = vld [vmem:[#allocation7 + $0x4] sm:$0xf]
    %v258 = vld [vmem:[#allocation7 + $0x8] sm:$0xf]
    %v259 = vld [vmem:[#allocation7 + $0xc] sm:$0xf]
    %v260 = vld [vmem:[#allocation7 + $0x10] sm:$0xf]
    %v261 = vld [vmem:[#allocation7 + $0x14] sm:$0xf]
    %v262 = vld [vmem:[#allocation7 + $0x18] sm:$0xf]
    %v263 = vld [vmem:[#allocation7 + $0x1c] sm:$0xf]
    %v264 = vld [vmem:[#allocation7 + $0x20] sm:$0xf]
    %v265 = vld [vmem:[#allocation7 + $0x24] sm:$0xf]
    %v266 = vld [vmem:[#allocation7 + $0x28] sm:$0xf]
    %v267 = vld [vmem:[#allocation7 + $0x2c] sm:$0xf]
    %v268 = vld [vmem:[#allocation7 + $0x30] sm:$0xf]
    %v269 = vld [vmem:[#allocation7 + $0x34] sm:$0xf]
    %v270 = vld [vmem:[#allocation7 + $0x38] sm:$0xf]
    %v271 = vld [vmem:[#allocation7 + $0x3c] sm:$0xf]
    %v272 = vld [vmem:[%s4] sm:$0x1]
    %v274 = vperm.slane %v272, 0
    %v292 = vunpack.c.l.b16 %v256
    %v293 = vunpack.c.l.b16 %v257
    %v294 = vunpack.c.l.b16 %v258
    %v295 = vunpack.c.l.b16 %v259
    %v296 = vunpack.c.l.b16 %v260
    %v297 = vunpack.c.l.b16 %v261
    %v298 = vunpack.c.l.b16 %v262
    %v299 = vunpack.c.l.b16 %v263
    %v300 = vunpack.c.l.b16 %v264
    %v301 = vunpack.c.l.b16 %v265
    %v302 = vunpack.c.l.b16 %v266
    %v303 = vunpack.c.l.b16 %v267
    %v304 = vunpack.c.l.b16 %v268
    %v305 = vunpack.c.l.b16 %v269
    %v306 = vunpack.c.l.b16 %v270
    %v307 = vunpack.c.l.b16 %v271
    %v308 = vpack.c.b16 %v293, %v292
    %v309 = vpack.c.b16 %v295, %v294
    %v310 = vpack.c.b16 %v297, %v296
    %v311 = vpack.c.b16 %v299, %v298
    %v312 = vpack.c.b16 %v301, %v300
    %v313 = vpack.c.b16 %v303, %v302
    %v314 = vpack.c.b16 %v305, %v304
    %v315 = vpack.c.b16 %v307, %v306
    %324 = vmatpush.bf16.msra.mxu0 %v315
    %325 = vmatpush.bf16.msra.mxu0 %v314
    %326 = vmatpush.bf16.msra.mxu0 %v313
    %327 = vmatpush.bf16.msra.mxu0 %v312
    %328 = vmatpush.bf16.msra.mxu0 %v311
    %329 = vmatpush.bf16.msra.mxu0 %v310
    %330 = vmatpush.bf16.msra.mxu0 %v309
    %331 = vmatpush.bf16.msra.mxu0 %v308
    %332 = vmatmul.bf16.gmra.mxu0 %v255
    %v333 = vpop.f32.mrf.mxu0
    %v334 = vadd.f32 %v274, %v333
    %v335 = vpop.f32.mrf.mxu0
    %336 = vdwg.mxu0
    %v337 = vmax.f32 %v334, 0.0
    %v338 = vpack.c.bf16 %v337, %v337
    %v339 = vld [vmem:[#allocation8] sm:$0xf]
    %v340 = vld [vmem:[#allocation8 + $0x4] sm:$0xf]
    %v341 = vld [vmem:[#allocation8 + $0x8] sm:$0xf]
    %v342 = vld [vmem:[#allocation8 + $0xc] sm:$0xf]
    %v343 = vld [vmem:[#allocation8 + $0x10] sm:$0xf]
    %v344 = vld [vmem:[#allocation8 + $0x14] sm:$0xf]
    %v345 = vld [vmem:[#allocation8 + $0x18] sm:$0xf]
    %v346 = vld [vmem:[#allocation8 + $0x1c] sm:$0xf]
    %v347 = vld [vmem:[#allocation8 + $0x20] sm:$0xf]
    %v348 = vld [vmem:[#allocation8 + $0x24] sm:$0xf]
    %v349 = vld [vmem:[#allocation8 + $0x28] sm:$0xf]
    %v350 = vld [vmem:[#allocation8 + $0x2c] sm:$0xf]
    %v351 = vld [vmem:[#allocation8 + $0x30] sm:$0xf]
    %v352 = vld [vmem:[#allocation8 + $0x34] sm:$0xf]
    %v353 = vld [vmem:[#allocation8 + $0x38] sm:$0xf]
    %v354 = vld [vmem:[#allocation8 + $0x3c] sm:$0xf]
    %v355 = vld [vmem:[%s6] sm:$0x1]
    %v357 = vperm.slane %v355, 0
    %v375 = vunpack.c.l.b16 %v339
    %v376 = vunpack.c.l.b16 %v340
    %v377 = vunpack.c.l.b16 %v341
    %v378 = vunpack.c.l.b16 %v342
    %v379 = vunpack.c.l.b16 %v343
    %v380 = vunpack.c.l.b16 %v344
    %v381 = vunpack.c.l.b16 %v345
    %v382 = vunpack.c.l.b16 %v346
    %v383 = vunpack.c.l.b16 %v347
    %v384 = vunpack.c.l.b16 %v348
    %v385 = vunpack.c.l.b16 %v349
    %v386 = vunpack.c.l.b16 %v350
    %v387 = vunpack.c.l.b16 %v351
    %v388 = vunpack.c.l.b16 %v352
    %v389 = vunpack.c.l.b16 %v353
    %v390 = vunpack.c.l.b16 %v354
    %v391 = vpack.c.b16 %v376, %v375
    %v392 = vpack.c.b16 %v378, %v377
    %v393 = vpack.c.b16 %v380, %v379
    %v394 = vpack.c.b16 %v382, %v381
    %v395 = vpack.c.b16 %v384, %v383
    %v396 = vpack.c.b16 %v386, %v385
    %v397 = vpack.c.b16 %v388, %v387
    %v398 = vpack.c.b16 %v390, %v389
    %407 = vmatpush.bf16.msra.mxu0 %v398
    %408 = vmatpush.bf16.msra.mxu0 %v397
    %409 = vmatpush.bf16.msra.mxu0 %v396
    %410 = vmatpush.bf16.msra.mxu0 %v395
    %411 = vmatpush.bf16.msra.mxu0 %v394
    %412 = vmatpush.bf16.msra.mxu0 %v393
    %413 = vmatpush.bf16.msra.mxu0 %v392
    %414 = vmatpush.bf16.msra.mxu0 %v391
    %415 = vmatmul.bf16.gmra.mxu0 %v338
    %v416 = vpop.f32.mrf.mxu0
    %v417 = vadd.f32 %v357, %v416
    %v418 = vpop.f32.mrf.mxu0
    %419 = vdwg.mxu0
    %420 = vst [vmem:[#allocation10] sm:$0xff] %v417
    // Predicated region
    $region46: #{tpu_custom_call.1} parent=1 // pred_check
      _
    $region47: #{tpu_custom_call.1} parent=1 // pred_check_branch
      %422 = sbr.rel (0) target = $region49
    $region48: #{tpu_custom_call.1} parent=1 // pred_region
      %424 = vsyncadd [#allocation4], 0
      %s426 = sshll.u32 [#allocation10], 4
      %s427 = int_to_ptr.vmem [resolvable:$true] %s426
      %s428 = sshll.u32 %s7, 4
      %s429 = int_to_ptr.hbm [resolvable:$true] %s428
      %431 = dma.vmem_to_hbm [thread:$0]  %s427, 128, %s429, [#allocation4]
    $region49: #{tpu_custom_call.1} parent=1 // pred_fallthru
      _
    // Predicated region
    $region50: #{tpu_custom_call.1} parent=1 // pred_check
      _
    $region51: #{tpu_custom_call.1} parent=1 // pred_check_branch
      %433 = sbr.rel (0) target = $region53
    $region52: #{tpu_custom_call.1} parent=1 // pred_region
      %435 = dma.done [#allocation4], 128
    $region53: #{tpu_custom_call.1} parent=1 // pred_fallthru
      _
    %436 = vsyncpa [#allocation3], 1
    %437 = vsyncpa [#allocation6], 1
    %438 = vsyncpa [#allocation9], 1
    %439 = vsyncpa [#allocation4], 1

</llo_original>
